<compile_context>
chip_gen: v5e
topology: v5e:2x2
jax: 0.10.0
libtpu: 0.0.40
codegen_flags: <defaults>
</compile_context>

<pallas_src>
import jax
import jax.numpy as jnp
from jax import lax
from jax.experimental import pallas as pl
from jax.experimental.pallas import tpu as pltpu

KSIZE = 11
PAD = KSIZE // 2


def _conv_gate_body(src_ref, w_ref, b_ref, o_ref):
    # src_ref: (Lp, Ct)   zero-padded input, length on sublanes, channels on lanes
    # w_ref  : (KSIZE, Ct) per-lane depthwise weights
    # b_ref  : (1, Ct)     per-lane bias
    # o_ref  : (L, Ct)     output block
    L, Ct = o_ref.shape

    # Bias broadcast hoisted once (outside the tap loop).
    acc = jnp.broadcast_to(b_ref[...].astype(jnp.float32), (L, Ct))

    # Depthwise 1D conv: 11 FMAs; each tap is a sublane-offset load from the
    # block ref (lane-aligned, no rotates), each weight a per-lane row.
    for k in range(KSIZE):
        tap = src_ref[k:k + L, :].astype(jnp.float32)   # no-op cast on f32 path
        wk = w_ref[k:k + 1, :].astype(jnp.float32)      # (1, Ct) per-lane scalars
        acc = acc + tap * wk

    # sigmoid(a) = 0.5*tanh(0.5*a) + 0.5  -> transcendental on the EUP slot.
    gate = 0.5 * jnp.tanh(0.5 * acc) + 0.5
    x_c = src_ref[PAD:PAD + L, :].astype(jnp.float32)   # center tap == original x
    o_ref[...] = (x_c * gate).astype(o_ref.dtype)


def pa_kernel_f32(xp_ref, w_ref, b_ref, o_ref):
    # f32 inputs: read taps directly from the input block (no scratch at all).
    _conv_gate_body(xp_ref, w_ref, b_ref, o_ref)


def pa_kernel_cast(xp_ref, w_ref, b_ref, o_ref, xf_ref):
    # Sub-32-bit inputs: hoist the dtype conversion out of the tap loop —
    # one f32 copy of the padded block, taps then read f32 sublane slices.
    xf_ref[...] = xp_ref[...].astype(jnp.float32)
    _conv_gate_body(xf_ref, w_ref, b_ref, o_ref)


def _round_up(n, m):
    return ((n + m - 1) // m) * m


def _device_info():
    """(vmem capacity bytes, has two TensorCores) with conservative fallbacks."""
    try:
        kind = jax.devices()[0].device_kind.lower()
    except Exception:
        kind = ""
    try:
        vmem_cap = int(pltpu.get_tpu_info().vmem_capacity_bytes)
    except Exception:
        vmem_cap = (64 << 20) if ("v7" in kind or not kind) else (128 << 20)
    two_tc = "v7" in kind
    return vmem_cap, two_tc


def _pick_lane_tile(Cp, Lp, L, itemsize, budget, use_cast_scratch, B, prefer_even_total):
    """Largest multiple-of-128 channel (lane) tile dividing Cp that fits the
    per-step VMEM budget; on 2-TC parts prefer an even total step count."""
    per_lane = ((2 * Lp + 2 * L) * itemsize            # double-buffered in + out
                + (Lp * 4 if use_cast_scratch else 0)  # f32 cast scratch
                + 2 * (KSIZE + 1) * 4)                 # weight + bias blocks
    cands = [ct for ct in range(128, Cp + 1, 128)
             if Cp % ct == 0 and ct * per_lane <= budget]
    if not cands:
        # TODO(synk): for very long sequences also tile L (with a 2*PAD halo);
        # fall back to the smallest lane-dense tile for now.
        return 128
    if prefer_even_total:
        even = [ct for ct in cands if (B * (Cp // ct)) % 2 == 0]
        if even:
            return max(even)
    return max(cands)


def pa_forward(x, weight, bias):
    """x: (B, C, L); weight: (C, 1, KSIZE); bias: (C,).  Returns (B, C, L)."""
    B, C, L = x.shape
    Lp = L + 2 * PAD
    Cp = _round_up(C, 128)
    itemsize = jnp.dtype(x.dtype).itemsize
    use_cast = jnp.dtype(x.dtype) != jnp.dtype(jnp.float32)

    vmem_cap, two_tc = _device_info()
    # ~16 MiB/step on 64-MiB-VMEM parts (v7x); bigger tiles on 128-MiB parts.
    budget = (16 << 20) if vmem_cap <= (64 << 20) else (40 << 20)
    vmem_limit = max(32 << 20, min(int(0.75 * vmem_cap), 96 << 20))

    Ct = _pick_lane_tile(Cp, Lp, L, itemsize, budget, use_cast, B, two_tc)

    # Channel-last, length-padded layout: L on sublanes, channels on lanes.
    xt = jnp.transpose(x, (0, 2, 1))                                   # (B, L, C)
    xp = jnp.pad(xt, ((0, 0), (PAD, PAD), (0, Cp - C)))                # (B, Lp, Cp)
    w2 = jnp.pad(weight.reshape(C, KSIZE).T.astype(jnp.float32),
                 ((0, 0), (0, Cp - C)))                                # (KSIZE, Cp)
    b2 = jnp.pad(bias.reshape(1, C).astype(jnp.float32),
                 ((0, 0), (0, Cp - C)))                                # (1, Cp)

    kernel = pa_kernel_cast if use_cast else pa_kernel_f32
    scratch = (pltpu.VMEM((Lp, Ct), jnp.float32),) if use_cast else ()

    out = pl.pallas_call(
        kernel,
        out_shape=jax.ShapeDtypeStruct((B, L, Cp), x.dtype),
        grid_spec=pltpu.PrefetchScalarGridSpec(
            num_scalar_prefetch=0,
            grid=(B, Cp // Ct),
            in_specs=[
                pl.BlockSpec((None, Lp, Ct), lambda b, j: (b, 0, j)),   # x (padded)
                pl.BlockSpec((KSIZE, Ct), lambda b, j: (0, j)),         # weights
                pl.BlockSpec((1, Ct), lambda b, j: (0, j)),             # bias
            ],
            out_specs=pl.BlockSpec((None, L, Ct), lambda b, j: (b, 0, j)),
            scratch_shapes=scratch,
        ),
        compiler_params=pltpu.CompilerParams(
            dimension_semantics=("parallel", "parallel"),
            vmem_limit_bytes=vmem_limit,
        ),
        cost_estimate=pl.CostEstimate(
            flops=(2 * KSIZE + 3) * B * L * Cp,
            transcendentals=B * L * Cp,
            bytes_accessed=(Lp + L) * B * Cp * itemsize + (KSIZE + 1) * Cp * 4,
        ),
    )(xp, w2, b2)

    return jnp.transpose(out[:, :, :C], (0, 2, 1))


def pa_reference(x, weight, bias):
    """Pure-JAX reference (mirrors torch.nn.Conv1d groups=dim + sigmoid gate)."""
    C = x.shape[1]
    y = lax.conv_general_dilated(
        x, weight,
        window_strides=(1,),
        padding=((PAD, PAD),),
        feature_group_count=C,
        dimension_numbers=("NCH", "OIH", "NCH"),
    ) + bias.reshape(1, C, 1)
    return x * jax.nn.sigmoid(y)


if __name__ == "__main__":
    B, C, L = 2, 4, 16  # dim = 4
    key = jax.random.PRNGKey(0)
    kx, kw, kb = jax.random.split(key, 3)

    x = jax.random.normal(kx, (B, C, L), dtype=jnp.float32)
    # Deterministic param init (PyTorch Conv1d shapes: (dim, 1, 11), (dim,)).
    bound = 1.0 / (1 * KSIZE) ** 0.5
    weight = jax.random.uniform(kw, (C, 1, KSIZE), jnp.float32, -bound, bound)
    bias = jax.random.uniform(kb, (C,), jnp.float32, -bound, bound)

    out = pa_forward(x, weight, bias)
    jax.block_until_ready(out)

    ref = pa_reference(x, weight, bias)
    assert jnp.allclose(out, ref, atol=1e-5, rtol=1e-5), "mismatch vs reference"
    print("KERNEL_OK")
</pallas_src>

<mosaic_0001>
module attributes {stable_mosaic.version = 11 : i64} {
  func.func @pa_kernel_f32(%arg0: i32, %arg1: i32, %arg2: memref<1x26x128xf32, #tpu.memory_space<vmem>>, %arg3: memref<11x128xf32, #tpu.memory_space<vmem>>, %arg4: memref<1x128xf32, #tpu.memory_space<vmem>>, %arg5: memref<1x16x128xf32, #tpu.memory_space<vmem>>) attributes {dimension_semantics = [#tpu.dimension_semantics<parallel>, #tpu.dimension_semantics<parallel>], iteration_bounds = array<i64: 2, 1>, scalar_prefetch = 0 : i64, scratch_operands = 0 : i64, tpu.core_type = #tpu.core_type<tc>, window_params = [{transform_indices = @transform_0, window_bounds = array<i64: 1, 26, 128>}, {transform_indices = @transform_1, window_bounds = array<i64: 11, 128>}, {transform_indices = @transform_2, window_bounds = array<i64: 1, 128>}, {transform_indices = @transform_3, window_bounds = array<i64: 1, 16, 128>}]} {
    %c0 = arith.constant 0 : index
    %c0_0 = arith.constant 0 : index
    %0 = vector.load %arg4[%c0, %c0_0] : memref<1x128xf32, #tpu.memory_space<vmem>>, vector<1x128xf32>
    %1 = vector.shape_cast %0 : vector<1x128xf32> to vector<1x128xf32>
    %2 = vector.broadcast %1 : vector<1x128xf32> to vector<16x128xf32>
    %c0_1 = arith.constant 0 : index
    %c0_2 = arith.constant 0 : index
    %c0_3 = arith.constant 0 : index
    %3 = vector.load %arg2[%c0_1, %c0_2, %c0_3] : memref<1x26x128xf32, #tpu.memory_space<vmem>>, vector<1x16x128xf32>
    %4 = vector.shape_cast %3 : vector<1x16x128xf32> to vector<16x128xf32>
    %c0_4 = arith.constant 0 : index
    %c0_5 = arith.constant 0 : index
    %5 = vector.load %arg3[%c0_4, %c0_5] : memref<11x128xf32, #tpu.memory_space<vmem>>, vector<1x128xf32>
    %6 = vector.broadcast %5 : vector<1x128xf32> to vector<16x128xf32>
    %7 = arith.mulf %4, %6 : vector<16x128xf32>
    %8 = arith.addf %2, %7 : vector<16x128xf32>
    %c0_6 = arith.constant 0 : index
    %c1 = arith.constant 1 : index
    %c0_7 = arith.constant 0 : index
    %9 = vector.load %arg2[%c0_6, %c1, %c0_7] : memref<1x26x128xf32, #tpu.memory_space<vmem>>, vector<1x16x128xf32>
    %10 = vector.shape_cast %9 : vector<1x16x128xf32> to vector<16x128xf32>
    %c1_8 = arith.constant 1 : index
    %c0_9 = arith.constant 0 : index
    %11 = vector.load %arg3[%c1_8, %c0_9] : memref<11x128xf32, #tpu.memory_space<vmem>>, vector<1x128xf32>
    %12 = vector.broadcast %11 : vector<1x128xf32> to vector<16x128xf32>
    %13 = arith.mulf %10, %12 : vector<16x128xf32>
    %14 = arith.addf %8, %13 : vector<16x128xf32>
    %c0_10 = arith.constant 0 : index
    %c2 = arith.constant 2 : index
    %c0_11 = arith.constant 0 : index
    %15 = vector.load %arg2[%c0_10, %c2, %c0_11] : memref<1x26x128xf32, #tpu.memory_space<vmem>>, vector<1x16x128xf32>
    %16 = vector.shape_cast %15 : vector<1x16x128xf32> to vector<16x128xf32>
    %c2_12 = arith.constant 2 : index
    %c0_13 = arith.constant 0 : index
    %17 = vector.load %arg3[%c2_12, %c0_13] : memref<11x128xf32, #tpu.memory_space<vmem>>, vector<1x128xf32>
    %18 = vector.broadcast %17 : vector<1x128xf32> to vector<16x128xf32>
    %19 = arith.mulf %16, %18 : vector<16x128xf32>
    %20 = arith.addf %14, %19 : vector<16x128xf32>
    %c0_14 = arith.constant 0 : index
    %c3 = arith.constant 3 : index
    %c0_15 = arith.constant 0 : index
    %21 = vector.load %arg2[%c0_14, %c3, %c0_15] : memref<1x26x128xf32, #tpu.memory_space<vmem>>, vector<1x16x128xf32>
    %22 = vector.shape_cast %21 : vector<1x16x128xf32> to vector<16x128xf32>
    %c3_16 = arith.constant 3 : index
    %c0_17 = arith.constant 0 : index
    %23 = vector.load %arg3[%c3_16, %c0_17] : memref<11x128xf32, #tpu.memory_space<vmem>>, vector<1x128xf32>
    %24 = vector.broadcast %23 : vector<1x128xf32> to vector<16x128xf32>
    %25 = arith.mulf %22, %24 : vector<16x128xf32>
    %26 = arith.addf %20, %25 : vector<16x128xf32>
    %c0_18 = arith.constant 0 : index
    %c4 = arith.constant 4 : index
    %c0_19 = arith.constant 0 : index
    %27 = vector.load %arg2[%c0_18, %c4, %c0_19] : memref<1x26x128xf32, #tpu.memory_space<vmem>>, vector<1x16x128xf32>
    %28 = vector.shape_cast %27 : vector<1x16x128xf32> to vector<16x128xf32>
    %c4_20 = arith.constant 4 : index
    %c0_21 = arith.constant 0 : index
    %29 = vector.load %arg3[%c4_20, %c0_21] : memref<11x128xf32, #tpu.memory_space<vmem>>, vector<1x128xf32>
    %30 = vector.broadcast %29 : vector<1x128xf32> to vector<16x128xf32>
    %31 = arith.mulf %28, %30 : vector<16x128xf32>
    %32 = arith.addf %26, %31 : vector<16x128xf32>
    %c0_22 = arith.constant 0 : index
    %c5 = arith.constant 5 : index
    %c0_23 = arith.constant 0 : index
    %33 = vector.load %arg2[%c0_22, %c5, %c0_23] : memref<1x26x128xf32, #tpu.memory_space<vmem>>, vector<1x16x128xf32>
    %34 = vector.shape_cast %33 : vector<1x16x128xf32> to vector<16x128xf32>
    %c5_24 = arith.constant 5 : index
    %c0_25 = arith.constant 0 : index
    %35 = vector.load %arg3[%c5_24, %c0_25] : memref<11x128xf32, #tpu.memory_space<vmem>>, vector<1x128xf32>
    %36 = vector.broadcast %35 : vector<1x128xf32> to vector<16x128xf32>
    %37 = arith.mulf %34, %36 : vector<16x128xf32>
    %38 = arith.addf %32, %37 : vector<16x128xf32>
    %c0_26 = arith.constant 0 : index
    %c6 = arith.constant 6 : index
    %c0_27 = arith.constant 0 : index
    %39 = vector.load %arg2[%c0_26, %c6, %c0_27] : memref<1x26x128xf32, #tpu.memory_space<vmem>>, vector<1x16x128xf32>
    %40 = vector.shape_cast %39 : vector<1x16x128xf32> to vector<16x128xf32>
    %c6_28 = arith.constant 6 : index
    %c0_29 = arith.constant 0 : index
    %41 = vector.load %arg3[%c6_28, %c0_29] : memref<11x128xf32, #tpu.memory_space<vmem>>, vector<1x128xf32>
    %42 = vector.broadcast %41 : vector<1x128xf32> to vector<16x128xf32>
    %43 = arith.mulf %40, %42 : vector<16x128xf32>
    %44 = arith.addf %38, %43 : vector<16x128xf32>
    %c0_30 = arith.constant 0 : index
    %c7 = arith.constant 7 : index
    %c0_31 = arith.constant 0 : index
    %45 = vector.load %arg2[%c0_30, %c7, %c0_31] : memref<1x26x128xf32, #tpu.memory_space<vmem>>, vector<1x16x128xf32>
    %46 = vector.shape_cast %45 : vector<1x16x128xf32> to vector<16x128xf32>
    %c7_32 = arith.constant 7 : index
    %c0_33 = arith.constant 0 : index
    %47 = vector.load %arg3[%c7_32, %c0_33] : memref<11x128xf32, #tpu.memory_space<vmem>>, vector<1x128xf32>
    %48 = vector.broadcast %47 : vector<1x128xf32> to vector<16x128xf32>
    %49 = arith.mulf %46, %48 : vector<16x128xf32>
    %50 = arith.addf %44, %49 : vector<16x128xf32>
    %c0_34 = arith.constant 0 : index
    %c8 = arith.constant 8 : index
    %c0_35 = arith.constant 0 : index
    %51 = vector.load %arg2[%c0_34, %c8, %c0_35] : memref<1x26x128xf32, #tpu.memory_space<vmem>>, vector<1x16x128xf32>
    %52 = vector.shape_cast %51 : vector<1x16x128xf32> to vector<16x128xf32>
    %c8_36 = arith.constant 8 : index
    %c0_37 = arith.constant 0 : index
    %53 = vector.load %arg3[%c8_36, %c0_37] : memref<11x128xf32, #tpu.memory_space<vmem>>, vector<1x128xf32>
    %54 = vector.broadcast %53 : vector<1x128xf32> to vector<16x128xf32>
    %55 = arith.mulf %52, %54 : vector<16x128xf32>
    %56 = arith.addf %50, %55 : vector<16x128xf32>
    %c0_38 = arith.constant 0 : index
    %c9 = arith.constant 9 : index
    %c0_39 = arith.constant 0 : index
    %57 = vector.load %arg2[%c0_38, %c9, %c0_39] : memref<1x26x128xf32, #tpu.memory_space<vmem>>, vector<1x16x128xf32>
    %58 = vector.shape_cast %57 : vector<1x16x128xf32> to vector<16x128xf32>
    %c9_40 = arith.constant 9 : index
    %c0_41 = arith.constant 0 : index
    %59 = vector.load %arg3[%c9_40, %c0_41] : memref<11x128xf32, #tpu.memory_space<vmem>>, vector<1x128xf32>
    %60 = vector.broadcast %59 : vector<1x128xf32> to vector<16x128xf32>
    %61 = arith.mulf %58, %60 : vector<16x128xf32>
    %62 = arith.addf %56, %61 : vector<16x128xf32>
    %c0_42 = arith.constant 0 : index
    %c10 = arith.constant 10 : index
    %c0_43 = arith.constant 0 : index
    %63 = vector.load %arg2[%c0_42, %c10, %c0_43] : memref<1x26x128xf32, #tpu.memory_space<vmem>>, vector<1x16x128xf32>
    %64 = vector.shape_cast %63 : vector<1x16x128xf32> to vector<16x128xf32>
    %c10_44 = arith.constant 10 : index
    %c0_45 = arith.constant 0 : index
    %65 = vector.load %arg3[%c10_44, %c0_45] : memref<11x128xf32, #tpu.memory_space<vmem>>, vector<1x128xf32>
    %66 = vector.broadcast %65 : vector<1x128xf32> to vector<16x128xf32>
    %67 = arith.mulf %64, %66 : vector<16x128xf32>
    %68 = arith.addf %62, %67 : vector<16x128xf32>
    %cst = arith.constant 5.000000e-01 : f32
    %69 = vector.broadcast %cst : f32 to vector<16x128xf32>
    %70 = arith.mulf %69, %68 : vector<16x128xf32>
    %71 = math.tanh %70 : vector<16x128xf32>
    %cst_46 = arith.constant 5.000000e-01 : f32
    %72 = vector.broadcast %cst_46 : f32 to vector<16x128xf32>
    %73 = arith.mulf %72, %71 : vector<16x128xf32>
    %cst_47 = arith.constant 5.000000e-01 : f32
    %74 = vector.broadcast %cst_47 : f32 to vector<16x128xf32>
    %75 = arith.addf %73, %74 : vector<16x128xf32>
    %c0_48 = arith.constant 0 : index
    %c5_49 = arith.constant 5 : index
    %c0_50 = arith.constant 0 : index
    %76 = vector.load %arg2[%c0_48, %c5_49, %c0_50] : memref<1x26x128xf32, #tpu.memory_space<vmem>>, vector<1x16x128xf32>
    %77 = vector.shape_cast %76 : vector<1x16x128xf32> to vector<16x128xf32>
    %78 = arith.mulf %77, %75 : vector<16x128xf32>
    %c0_51 = arith.constant 0 : index
    %c0_52 = arith.constant 0 : index
    %c0_53 = arith.constant 0 : index
    %79 = vector.load %arg5[%c0_51, %c0_52, %c0_53] : memref<1x16x128xf32, #tpu.memory_space<vmem>>, vector<1x16x128xf32>
    %80 = vector.shape_cast %79 : vector<1x16x128xf32> to vector<16x128xf32>
    %81 = vector.shape_cast %78 : vector<16x128xf32> to vector<1x16x128xf32>
    tpu.vector_store %arg5[%c0_51, %c0_52, %c0_53], %81 {strides = array<i32>} : memref<1x16x128xf32, #tpu.memory_space<vmem>>, vector<1x16x128xf32>,
    return
  }
  func.func @transform_0(%arg0: i32, %arg1: i32) -> (i32, i32, i32) {
    %c0_i32 = arith.constant 0 : i32
    %c0_i32_0 = arith.constant 0 : i32
    return %arg0, %c0_i32, %arg1 : i32, i32, i32
  }
  func.func @transform_1(%arg0: i32, %arg1: i32) -> (i32, i32) {
    %c0_i32 = arith.constant 0 : i32
    %c0_i32_0 = arith.constant 0 : i32
    return %c0_i32, %arg1 : i32, i32
  }
  func.func @transform_2(%arg0: i32, %arg1: i32) -> (i32, i32) {
    %c0_i32 = arith.constant 0 : i32
    %c0_i32_0 = arith.constant 0 : i32
    return %c0_i32, %arg1 : i32, i32
  }
  func.func @transform_3(%arg0: i32, %arg1: i32) -> (i32, i32, i32) {
    %c0_i32 = arith.constant 0 : i32
    %c0_i32_0 = arith.constant 0 : i32
    return %arg0, %c0_i32, %arg1 : i32, i32, i32
  }
}

</mosaic_0001>

<llo_original>
// kernel: tpu_custom_call.1
$region0: #{tpu_custom_call.1}
  #allocation0 [shape = 'u32[]', space=smem, size = 0x4, offset = 0x4, fixed_abs, tag = 'smem constant byte address 0x4 - core index']
  #allocation1 [shape = 'u32[72,128]{1,0:T(1,128)}', space=vmem, size = 0x9000, scoped, tag = 'internal scratch']
  %s0 = inlined_call_operand.vmem [shape: f32[2,26,128], index: 0, kind: input, shape index: {}]
  %s1 = inlined_call_operand.vmem [shape: f32[11,128], index: 1, kind: input, shape index: {}]
  %s2 = inlined_call_operand.vmem [shape: f32[1,128], index: 2, kind: input, shape index: {}]
  %s3 = inlined_call_operand.hbm [shape: f32[2,16,128], index: 3, kind: output, shape index: {}]
  %s4 = sld [smem:[#allocation0]]
  $region45: #{tpu_custom_call.1} parent=0
    _
  %s6 = ssub.s32 1, %s4
  %s7 = scalar_select 0, %s6, %s4
  $region1: #{tpu_custom_call.1} parent=0
    #allocation2 [shape = 'u8[16384]{0}', space=vmem, size = 0x4000, scoped, tag = 'output window, operand 0']
    #allocation3 [shape = 's32[2]{0}', space=sflag, size = 0x8, scoped, tag = 'scoped memory for tpu_custom_call.1']
    %8 = vsyncpa [#allocation3], 0
    %s9 = scalar_lea.sflag [#allocation3], 1
    %10 = vsyncpa %s9, 0
    loop: start=0, step=1, limit=4
    $region2: #{tpu_custom_call.1} parent=1 // loop_pre_header
      _
    $region3: #{tpu_custom_call.1} parent=1 // loop_header
      %s12 = sphi 0, %s16
      %p13 = scmp.ge.s32.totalorder %s12, 4
      %s19 = sphi 0, %s31
      %s20 = sphi 0, %s27
      %s21 = sphi 0, %s19
      %s22 = sphi 0, %s20
      %s23 = sphi 0, %s21
      %s24 = sphi 0, %s22
      %s36 = sphi 0, %s38
      %s39 = sphi 0, %s36
      %s40 = sphi 0, %s39
      %s56 = sphi 0, %s40
      %s62 = sphi 0, %s64
      %s65 = sphi 0, %s62
      %s66 = sphi 0, %s65
      %s82 = sphi 0, %s66
      %s88 = sphi 0, %s90
      %s91 = sphi 0, %s88
      %s92 = sphi 0, %s91
      %s108 = sphi 0, %s92
      %s116 = sphi 0, %s118
      %s119 = sphi 0, %s116
      %s120 = sphi 0, %s119
      %s136 = sphi 0, %s120
    $region4: #{tpu_custom_call.1} parent=1 // loop_header_branch
      %15 = sbr.rel (%p13) target = $region8
    $region5: #{tpu_custom_call.1} parent=1 // loop_body
      %s17 = ssub.s32 %s12, 1
      %s18 = ssub.s32 %s12, 2
      %s25 = sadd.s32 1, %s20
      %p26 = scmp.ge.s32.totalorder %s25, 1
      %s27 = scalar_select %p26, 0, %s25
      %s28 = sadd.s32 1, %s19
      %s29 = scalar_select %p26, %s28, %s19
      %p30 = scmp.ge.s32.totalorder %s29, 2
      %s31 = scalar_select %p30, 0, %s29
      %s32 = ssub.s32 %s19, %s31
      %s33 = ssub.s32 %s20, %s27
      %s34 = sor.u32 %s32, %s33
      %p35 = scmp.eq.s32.totalorder %s34, 0
      %s37 = sadd.s32 %s36, 1
      %s38 = scalar_select %p35, %s36, %s37
      %p41 = pneg %p35
      %p42 = scmp.eq.s32.totalorder %s12, 1
      %p43 = por %p41, %p42
      %p44 = scmp.ne.s32.totalorder %s36, %s39
      %p45 = scmp.eq.s32.totalorder %s12, 0
      %p46 = por %p44, %p45
      %p47 = scmp.ne.s32.totalorder %s36, %s39
      %p48 = scmp.eq.s32.totalorder %s17, 1
      %p49 = por %p47, %p48
      %p50 = scmp.ne.s32.totalorder %s39, %s40
      %p51 = scmp.eq.s32.totalorder %s17, 0
      %p52 = por %p50, %p51
      %p53 = scmp.ne.s32.totalorder %s39, %s40
      %p54 = scmp.eq.s32.totalorder %s18, 1
      %p55 = por %p53, %p54
      %p57 = scmp.ne.s32.totalorder %s40, %s56
      %p58 = scmp.eq.s32.totalorder %s18, 0
      %p59 = por %p57, %p58
      %s60 = ssub.s32 %s20, %s27
      %p61 = scmp.eq.s32.totalorder %s60, 0
      %s63 = sadd.s32 %s62, 1
      %s64 = scalar_select %p61, %s62, %s63
      %p67 = pneg %p61
      %p68 = scmp.eq.s32.totalorder %s12, 1
      %p69 = por %p67, %p68
      %p70 = scmp.ne.s32.totalorder %s62, %s65
      %p71 = scmp.eq.s32.totalorder %s12, 0
      %p72 = por %p70, %p71
      %p73 = scmp.ne.s32.totalorder %s62, %s65
      %p74 = scmp.eq.s32.totalorder %s17, 1
      %p75 = por %p73, %p74
      %p76 = scmp.ne.s32.totalorder %s65, %s66
      %p77 = scmp.eq.s32.totalorder %s17, 0
      %p78 = por %p76, %p77
      %p79 = scmp.ne.s32.totalorder %s65, %s66
      %p80 = scmp.eq.s32.totalorder %s18, 1
      %p81 = por %p79, %p80
      %p83 = scmp.ne.s32.totalorder %s66, %s82
      %p84 = scmp.eq.s32.totalorder %s18, 0
      %p85 = por %p83, %p84
      %s86 = ssub.s32 %s20, %s27
      %p87 = scmp.eq.s32.totalorder %s86, 0
      %s89 = sadd.s32 %s88, 1
      %s90 = scalar_select %p87, %s88, %s89
      %p93 = pneg %p87
      %p94 = scmp.eq.s32.totalorder %s12, 1
      %p95 = por %p93, %p94
      %p96 = scmp.ne.s32.totalorder %s88, %s91
      %p97 = scmp.eq.s32.totalorder %s12, 0
      %p98 = por %p96, %p97
      %p99 = scmp.ne.s32.totalorder %s88, %s91
      %p100 = scmp.eq.s32.totalorder %s17, 1
      %p101 = por %p99, %p100
      %p102 = scmp.ne.s32.totalorder %s91, %s92
      %p103 = scmp.eq.s32.totalorder %s17, 0
      %p104 = por %p102, %p103
      %p105 = scmp.ne.s32.totalorder %s91, %s92
      %p106 = scmp.eq.s32.totalorder %s18, 1
      %p107 = por %p105, %p106
      %p109 = scmp.ne.s32.totalorder %s92, %s108
      %p110 = scmp.eq.s32.totalorder %s18, 0
      %p111 = por %p109, %p110
      %s112 = ssub.s32 %s19, %s31
      %s113 = ssub.s32 %s20, %s27
      %s114 = sor.u32 %s112, %s113
      %p115 = scmp.eq.s32.totalorder %s114, 0
      %s117 = sadd.s32 %s116, 1
      %s118 = scalar_select %p115, %s116, %s117
      %p121 = pneg %p115
      %p122 = scmp.eq.s32.totalorder %s12, 1
      %p123 = por %p121, %p122
      %p124 = scmp.ne.s32.totalorder %s116, %s119
      %p125 = scmp.eq.s32.totalorder %s12, 0
      %p126 = por %p124, %p125
      %p127 = scmp.ne.s32.totalorder %s116, %s119
      %p128 = scmp.eq.s32.totalorder %s17, 1
      %p129 = por %p127, %p128
      %p130 = scmp.ne.s32.totalorder %s119, %s120
      %p131 = scmp.eq.s32.totalorder %s17, 0
      %p132 = por %p130, %p131
      %p133 = scmp.ne.s32.totalorder %s119, %s120
      %p134 = scmp.eq.s32.totalorder %s18, 1
      %p135 = por %p133, %p134
      %p137 = scmp.ne.s32.totalorder %s120, %s136
      %p138 = scmp.eq.s32.totalorder %s18, 0
      %p139 = por %p137, %p138
      %p140 = scmp.le.s32.totalorder 1, %s12
      %p141 = scmp.lt.s32.totalorder %s12, 3
      %p142 = pnand %p140, %p141
      %p143 = pneg %p142
      // Predicated region
      $region9: #{tpu_custom_call.1} parent=5 // pred_check
        _
      $region10: #{tpu_custom_call.1} parent=5 // pred_check_branch
        %145 = sbr.rel (%p142) target = $region12
      $region11: #{tpu_custom_call.1} parent=5 // pred_region
        %s146 = ssub.s32 %s12, 1
        // Predicated region
        $region13: #{tpu_custom_call.1} parent=11 // pred_check
          %p147 = pneg %p78
        $region14: #{tpu_custom_call.1} parent=11 // pred_check_branch
          %149 = sbr.rel (%p147) target = $region16
        $region15: #{tpu_custom_call.1} parent=11 // pred_region
          %p150 = scmp.lt.s32.totalorder %s22, 0
          %s151 = scalar_select %p150, %s22, 0
          %s152 = smul.addr %s151, 8
          %s153 = scalar_lea.vmem %s1, %s152
        $region16: #{tpu_custom_call.1} parent=11 // pred_fallthru
          _
        // Predicated region
        $region17: #{tpu_custom_call.1} parent=11 // pred_check
          %p154 = pneg %p104
        $region18: #{tpu_custom_call.1} parent=11 // pred_check_branch
          %156 = sbr.rel (%p154) target = $region20
        $region19: #{tpu_custom_call.1} parent=11 // pred_region
          %p157 = scmp.lt.s32.totalorder %s22, 0
          %s158 = scalar_select %p157, %s22, 0
          %s159 = scalar_lea.vmem %s2, %s158
        $region20: #{tpu_custom_call.1} parent=11 // pred_fallthru
          _
      $region12: #{tpu_custom_call.1} parent=5 // pred_fallthru
        _
      %p160 = scmp.lt.s32.totalorder %s12, 2
      // Predicated region
      $region21: #{tpu_custom_call.1} parent=5 // pred_check
        %p161 = pneg %p160
      $region22: #{tpu_custom_call.1} parent=5 // pred_check_branch
        %163 = sbr.rel (%p161) target = $region24
      $region23: #{tpu_custom_call.1} parent=5 // pred_region
        // Predicated region
        $region25: #{tpu_custom_call.1} parent=23 // pred_check
          %p164 = pneg %p46
        $region26: #{tpu_custom_call.1} parent=23 // pred_check_branch
          %166 = sbr.rel (%p164) target = $region28
        $region27: #{tpu_custom_call.1} parent=23 // pred_region
          %p167 = scmp.lt.s32.totalorder %s19, 1
          %s168 = scalar_select %p167, %s19, 1
          %p169 = scmp.lt.s32.totalorder %s20, 0
          %s170 = scalar_select %p169, %s20, 0
          %s171 = smul.addr %s168, 4
          %s172 = sadd.s32 %s170, %s171
          %s173 = smul.addr %s172, 8
          %s174 = scalar_lea.vmem %s0, %s173
        $region28: #{tpu_custom_call.1} parent=23 // pred_fallthru
          _
      $region24: #{tpu_custom_call.1} parent=5 // pred_fallthru
        _
      %p175 = scmp.le.s32.totalorder 1, %s12
      %p176 = scmp.lt.s32.totalorder %s12, 3
      %p177 = pnand %p175, %p176
      %p178 = pneg %p177
      // Predicated region
      $region29: #{tpu_custom_call.1} parent=5 // pred_check
        _
      $region30: #{tpu_custom_call.1} parent=5 // pred_check_branch
        %180 = sbr.rel (%p177) target = $region32
      $region31: #{tpu_custom_call.1} parent=5 // pred_region
        %s181 = ssub.s32 %s12, 1
        %p182 = scmp.lt.s32.totalorder %s21, 1
        %s183 = scalar_select %p182, %s21, 1
        %p184 = scmp.lt.s32.totalorder %s22, 0
        %s185 = scalar_select %p184, %s22, 0
        %s186 = smul.addr %s183, 4
        %s187 = sadd.s32 %s185, %s186
        %s188 = smul.addr %s187, 8
        %s189 = scalar_lea.vmem %s0, %s188
        %p190 = pneg %p52
        %p191 = pneg %p49
        %p192 = scmp.lt.s32.totalorder %s22, 0
        %s193 = scalar_select %p192, %s22, 0
        %s194 = smul.addr %s193, 8
        %s195 = scalar_lea.vmem %s1, %s194
        %p196 = pneg %p78
        %p197 = pneg %p75
        %p198 = scmp.lt.s32.totalorder %s22, 0
        %s199 = scalar_select %p198, %s22, 0
        %s200 = scalar_lea.vmem %s2, %s199
        %p201 = pneg %p104
        %p202 = pneg %p101
        %p203 = pneg %p132
        %p204 = pneg %p129
        %s205 = sand.u32 %s119, 1
        %s206 = scalar_lea.sflag [#allocation3], %s205
        %s207 = sand.u32 %s119, 1
        %s208 = smul.addr %s207, 16
        %s209 = scalar_lea.vmem [#allocation2], %s208
        %p210 = scmp.lt.s32.totalorder %s21, 1
        %s211 = scalar_select %p210, %s21, 1
        %p212 = scmp.lt.s32.totalorder %s22, 0
        %s213 = scalar_select %p212, %s22, 0
        %s214 = smul.addr %s211, 4
        %s215 = sadd.s32 %s213, %s214
        %s216 = smul.addr %s215, 8
        %s217 = scalar_lea.vmem %s0, %s216
        %p218 = scmp.lt.s32.totalorder %s22, 0
        %s219 = scalar_select %p218, %s22, 0
        %s220 = smul.addr %s219, 8
        %s221 = scalar_lea.vmem %s1, %s220
        %p222 = scmp.lt.s32.totalorder %s22, 0
        %s223 = scalar_select %p222, %s22, 0
        %s224 = scalar_lea.vmem %s2, %s223
        %v225 = vld [vmem:[%s224] sm:$0x1]
        %v227 = vperm.slane %v225, 0
        %v229 = vld [vmem:[%s217] sm:$0xff]
        %v230 = vld [vmem:[%s217 + $0x8] sm:$0xff]
        %v231 = vld [vmem:[%s221] sm:$0x1]
        %v232 = vperm.slane %v231, 0
        %v233 = vmul.f32 %v229, %v232
        %v234 = vmul.f32 %v230, %v232
        %v235 = vadd.f32 %v227, %v233
        %v236 = vadd.f32 %v227, %v234
        %v237 = vld [vmem:[%s217 + $0x1] sm:$0xff]
        %v238 = vld [vmem:[%s217 + $0x9] sm:$0xff]
        %v239 = vld [vmem:[%s221 + $0x1] sm:$0x1]
        %v240 = vperm.slane %v239, 0
        %v241 = vmul.f32 %v237, %v240
        %v242 = vmul.f32 %v238, %v240
        %v243 = vadd.f32 %v235, %v241
        %v244 = vadd.f32 %v236, %v242
        %v245 = vld [vmem:[%s217 + $0x2] sm:$0xff]
        %v246 = vld [vmem:[%s217 + $0xa] sm:$0xff]
        %v247 = vld [vmem:[%s221 + $0x2] sm:$0x1]
        %v248 = vperm.slane %v247, 0
        %v249 = vmul.f32 %v245, %v248
        %v250 = vmul.f32 %v246, %v248
        %v251 = vadd.f32 %v243, %v249
        %v252 = vadd.f32 %v244, %v250
        %v253 = vld [vmem:[%s217 + $0x3] sm:$0xff]
        %v254 = vld [vmem:[%s217 + $0xb] sm:$0xff]
        %v255 = vld [vmem:[%s221 + $0x3] sm:$0x1]
        %v256 = vperm.slane %v255, 0
        %v257 = vmul.f32 %v253, %v256
        %v258 = vmul.f32 %v254, %v256
        %v259 = vadd.f32 %v251, %v257
        %v260 = vadd.f32 %v252, %v258
        %v261 = vld [vmem:[%s217 + $0x4] sm:$0xff]
        %v262 = vld [vmem:[%s217 + $0xc] sm:$0xff]
        %v263 = vld [vmem:[%s221 + $0x4] sm:$0x1]
        %v264 = vperm.slane %v263, 0
        %v265 = vmul.f32 %v261, %v264
        %v266 = vmul.f32 %v262, %v264
        %v267 = vadd.f32 %v259, %v265
        %v268 = vadd.f32 %v260, %v266
        %v269 = vld [vmem:[%s217 + $0x5] sm:$0xff]
        %v270 = vld [vmem:[%s217 + $0xd] sm:$0xff]
        %v271 = vld [vmem:[%s221 + $0x5] sm:$0x1]
        %v272 = vperm.slane %v271, 0
        %v273 = vmul.f32 %v269, %v272
        %v274 = vmul.f32 %v270, %v272
        %v275 = vadd.f32 %v267, %v273
        %v276 = vadd.f32 %v268, %v274
        %v277 = vld [vmem:[%s217 + $0x6] sm:$0xff]
        %v278 = vld [vmem:[%s217 + $0xe] sm:$0xff]
        %v279 = vld [vmem:[%s221 + $0x6] sm:$0x1]
        %v280 = vperm.slane %v279, 0
        %v281 = vmul.f32 %v277, %v280
        %v282 = vmul.f32 %v278, %v280
        %v283 = vadd.f32 %v275, %v281
        %v284 = vadd.f32 %v276, %v282
        %v285 = vld [vmem:[%s217 + $0x7] sm:$0xff]
        %v286 = vld [vmem:[%s217 + $0xf] sm:$0xff]
        %v287 = vld [vmem:[%s221 + $0x7] sm:$0x1]
        %v288 = vperm.slane %v287, 0
        %v289 = vmul.f32 %v285, %v288
        %v290 = vmul.f32 %v286, %v288
        %v291 = vadd.f32 %v283, %v289
        %v292 = vadd.f32 %v284, %v290
        %v293 = vld [vmem:[%s217 + $0x10] sm:$0xff]
        %v294 = vld [vmem:[%s221 + $0x8] sm:$0x1]
        %v295 = vperm.slane %v294, 0
        %v296 = vmul.f32 %v230, %v295
        %v297 = vmul.f32 %v293, %v295
        %v298 = vadd.f32 %v291, %v296
        %v299 = vadd.f32 %v292, %v297
        %v300 = vld [vmem:[%s217 + $0x11] sm:$0xff]
        %v301 = vld [vmem:[%s221 + $0x9] sm:$0x1]
        %v302 = vperm.slane %v301, 0
        %v303 = vmul.f32 %v238, %v302
        %v304 = vmul.f32 %v300, %v302
        %v305 = vadd.f32 %v298, %v303
        %v306 = vadd.f32 %v299, %v304
        %v307 = vld [vmem:[%s217 + $0xa] sm:$0xff]
        %v308 = vld [vmem:[%s217 + $0x12] sm:$0xff]
        %v309 = vld [vmem:[%s221 + $0xa] sm:$0x1]
        %v310 = vperm.slane %v309, 0
        %v311 = vmul.f32 %v307, %v310
        %v312 = vmul.f32 %v308, %v310
        %v313 = vadd.f32 %v305, %v311
        %v314 = vadd.f32 %v306, %v312
        %v315 = vmul.f32 %v313, 0.5
        %v316 = vmul.f32 %v314, 0.5
        %v317 = vtanh.pop %v315
        %v318 = vtanh.pop %v316
        %v319 = vmul.f32 %v317, 0.5
        %v320 = vmul.f32 %v318, 0.5
        %v321 = vadd.f32 %v319, 0.5
        %v322 = vadd.f32 %v320, 0.5
        %v323 = vmul.f32 %v269, %v321
        %v324 = vmul.f32 %v270, %v322
        %325 = vst [vmem:[%s209] sm:$0xff] %v323
        %326 = vst [vmem:[%s209 + $0x8] sm:$0xff] %v324
        %s327 = sand.u32 %s119, 1
        %s328 = scalar_lea.sflag [#allocation3], %s327
        %s329 = sand.u32 %s119, 1
        %s330 = smul.addr %s329, 16
        %s331 = scalar_lea.vmem [#allocation2], %s330
        // Predicated region
        $region33: #{tpu_custom_call.1} parent=31 // pred_check
          %p332 = pneg %p129
        $region34: #{tpu_custom_call.1} parent=31 // pred_check_branch
          %334 = sbr.rel (%p332) target = $region36
        $region35: #{tpu_custom_call.1} parent=31 // pred_region
          %336 = vsyncadd %s328, 0
          %s337 = smul.addr %s21, 2
          %s338 = sadd.s32 %s22, %s337
          %s339 = smul.addr %s338, 8
          %s340 = scalar_lea.hbm %s3, %s339
          %s341 = sshll.u32 %s331, 4
          %s342 = int_to_ptr.vmem [resolvable:$true] %s341
          %s343 = sshll.u32 %s340, 4
          %s344 = int_to_ptr.hbm [resolvable:$true] %s343
          %349 = dma.vmem_to_hbm [thread:$0]  %s342, 256, %s344, %s328, 128, 128, 8
        $region36: #{tpu_custom_call.1} parent=31 // pred_fallthru
          _
      $region32: #{tpu_custom_call.1} parent=5 // pred_fallthru
        _
      %p350 = scmp.le.s32.totalorder 2, %s12
      // Predicated region
      $region37: #{tpu_custom_call.1} parent=5 // pred_check
        %p351 = pneg %p350
      $region38: #{tpu_custom_call.1} parent=5 // pred_check_branch
        %353 = sbr.rel (%p351) target = $region40
      $region39: #{tpu_custom_call.1} parent=5 // pred_region
        %s354 = ssub.s32 %s12, 2
        // Predicated region
        $region41: #{tpu_custom_call.1} parent=39 // pred_check
          %p355 = pneg %p135
        $region42: #{tpu_custom_call.1} parent=39 // pred_check_branch
          %357 = sbr.rel (%p355) target = $region44
        $region43: #{tpu_custom_call.1} parent=39 // pred_region
          %s358 = sand.u32 %s120, 1
          %s359 = scalar_lea.sflag [#allocation3], %s358
          %s360 = sand.u32 %s120, 1
          %s361 = smul.addr %s360, 16
          %s362 = scalar_lea.vmem [#allocation2], %s361
          %364 = dma.done %s359, 256
        $region44: #{tpu_custom_call.1} parent=39 // pred_fallthru
          _
      $region40: #{tpu_custom_call.1} parent=5 // pred_fallthru
        _
    $region6: #{tpu_custom_call.1} parent=1 // loop_footer
      %s16 = sadd.s32 1, %s12
    $region7: #{tpu_custom_call.1} parent=1 // loop_footer_branch
      %11 = sbr.rel target = $region3
    $region8: #{tpu_custom_call.1} parent=1 // loop_exit
      _
    %365 = vsyncpa [#allocation3], 1
    %s366 = scalar_lea.sflag [#allocation3], 1
    %367 = vsyncpa %s366, 1

</llo_original>
